<compile_context>
chip_gen: v7x
topology: tpu7x:2x2x1
jax: 0.10.0
libtpu: 0.0.40
codegen_flags: <defaults>
</compile_context>

<pallas_src>
import jax
import jax.numpy as jnp
from jax.experimental import pallas as pl
from jax.experimental.pallas import tpu as pltpu


def _pos_emb_kernel(x_ref, w1_ref, s1_ref, w2_ref, b2_ref, o_ref):
    # x_ref:  (tile_n, C_in)   points-major input tile (batch dim squeezed)
    # w1_ref: (F, C_in)        conv1 weight with BN scale folded in
    # s1_ref: (F, 1)           folded conv1 bias + BN shift
    # w2_ref: (F, F)           conv2 weight
    # b2_ref: (F, 1)           conv2 bias
    # o_ref:  (F, tile_n)      channel-major (lane-dense) output tile
    x = x_ref[...]

    # Conv1d(k=1) + BN(eval) fused:  h = relu(W1f @ x^T + shift)  -> (F, tile_n)
    h = jax.lax.dot_general(
        w1_ref[...], x,
        dimension_numbers=(((1,), (1,)), ((), ())),   # contract C_in with C_in
        preferred_element_type=jnp.float32)
    h = jnp.maximum(h + s1_ref[...], 0.0)

    # Second Conv1d(k=1):  out = W2 @ h + b2  -> (F, tile_n)
    out = jnp.dot(w2_ref[...], h, preferred_element_type=jnp.float32) + b2_ref[...]
    o_ref[...] = out.astype(o_ref.dtype)


def _choose_tile_n(N, max_tile=2048):
    """Lane-dense point tile: multiple of 128 dividing N, else full extent."""
    if N % 128 == 0:
        tile = 128
        while tile * 2 <= min(N, max_tile) and N % (tile * 2) == 0:
            tile *= 2
        return tile
    return N  # full-extent block (allowed when block dim equals array dim)


def position_embedding_learned(xyz, params, *, tile_n=None):
    """xyz: (B, N, C_in) float32. Returns (B, num_pos_feats, N) like PyTorch."""
    B, N, C_in = xyz.shape
    F = params["w1"].shape[0]
    eps = 1e-5

    # Glue (plain JAX): fold eval-mode BN + conv1 bias into weight/shift.
    scale = params["gamma"] / jnp.sqrt(params["running_var"] + eps)      # (F,)
    w1_fused = params["w1"] * scale[:, None]                             # (F, C_in)
    shift_fused = (params["b1"] * scale
                   + params["beta"] - params["running_mean"] * scale)    # (F,)
    s1 = shift_fused.reshape(F, 1)
    w2 = params["w2"]                                                    # (F, F)
    b2 = params["b2"].reshape(F, 1)

    if tile_n is None:
        tile_n = _choose_tile_n(N)
    assert N % tile_n == 0
    n_tiles = N // tile_n

    out = pl.pallas_call(
        _pos_emb_kernel,
        out_shape=jax.ShapeDtypeStruct((B, F, N), jnp.float32),
        grid_spec=pltpu.PrefetchScalarGridSpec(
            num_scalar_prefetch=0,
            grid=(B, n_tiles),
            in_specs=[
                # xyz tile: squeeze batch, (tile_n, C_in) in the kernel
                pl.BlockSpec((None, tile_n, C_in), lambda b, j: (b, j, 0)),
                pl.BlockSpec((F, C_in), lambda b, j: (0, 0)),   # w1 (BN-folded)
                pl.BlockSpec((F, 1), lambda b, j: (0, 0)),      # folded shift
                pl.BlockSpec((F, F), lambda b, j: (0, 0)),      # w2
                pl.BlockSpec((F, 1), lambda b, j: (0, 0)),      # b2
            ],
            # channel-major, lane-dense output tile -> (B, F, N) directly
            out_specs=pl.BlockSpec((None, F, tile_n), lambda b, j: (b, 0, j)),
        ),
        compiler_params=pltpu.CompilerParams(
            dimension_semantics=("parallel", "parallel")),
    )(xyz, w1_fused, s1, w2, b2)

    return out


def _reference(xyz, params):
    """Plain-JAX reference of the PyTorch forward (eval-mode BN)."""
    eps = 1e-5
    x = jnp.transpose(xyz, (0, 2, 1))                               # (B, C_in, N)
    h = jnp.einsum("fc,bcn->bfn", params["w1"], x) + params["b1"][None, :, None]
    h = (h - params["running_mean"][None, :, None]) / jnp.sqrt(
        params["running_var"][None, :, None] + eps)
    h = h * params["gamma"][None, :, None] + params["beta"][None, :, None]
    h = jnp.maximum(h, 0.0)
    out = jnp.einsum("of,bfn->bon", params["w2"], h) + params["b2"][None, :, None]
    return out


if __name__ == "__main__":
    # Small shapes consistent with the module: batch=2, input_channel=4,
    # num_pos_feats=32, N=256 points (exercises the lane-dense tiled path).
    B, N, C_in, F = 2, 256, 4, 32

    key = jax.random.PRNGKey(0)
    k = jax.random.split(key, 8)

    params = {
        # Conv1d(C_in -> F, k=1): torch weight (F, C_in, 1) squeezed to (F, C_in)
        "w1": 0.1 * jax.random.normal(k[0], (F, C_in), jnp.float32),
        "b1": 0.05 * jax.random.normal(k[1], (F,), jnp.float32),
        # BatchNorm1d(F) parameters + running stats (eval mode)
        "gamma": 1.0 + 0.1 * jax.random.normal(k[2], (F,), jnp.float32),
        "beta": 0.1 * jax.random.normal(k[3], (F,), jnp.float32),
        "running_mean": 0.05 * jax.random.normal(k[4], (F,), jnp.float32),
        "running_var": 1.0 + 0.1 * jax.random.uniform(k[5], (F,), jnp.float32),
        # Conv1d(F -> F, k=1)
        "w2": 0.1 * jax.random.normal(k[6], (F, F), jnp.float32),
        "b2": 0.05 * jax.random.normal(k[7], (F,), jnp.float32),
    }

    xyz = jax.random.normal(key, (B, N, C_in), jnp.float32)

    out = position_embedding_learned(xyz, params)
    out = jax.block_until_ready(out)

    ref = _reference(xyz, params)
    assert out.shape == (B, F, N), out.shape
    assert jnp.allclose(out, ref, atol=1e-5, rtol=1e-5), float(
        jnp.max(jnp.abs(out - ref)))

    print("KERNEL_OK")
</pallas_src>

<mosaic_0001>
module attributes {stable_mosaic.version = 11 : i64} {
  func.func @_pos_emb_kernel(%arg0: i32, %arg1: i32, %arg2: memref<1x256x4xf32, #tpu.memory_space<vmem>>, %arg3: memref<32x4xf32, #tpu.memory_space<vmem>>, %arg4: memref<32x1xf32, #tpu.memory_space<vmem>>, %arg5: memref<32x32xf32, #tpu.memory_space<vmem>>, %arg6: memref<32x1xf32, #tpu.memory_space<vmem>>, %arg7: memref<1x32x256xf32, #tpu.memory_space<vmem>>) attributes {dimension_semantics = [#tpu.dimension_semantics<parallel>, #tpu.dimension_semantics<parallel>], iteration_bounds = array<i64: 2, 1>, scalar_prefetch = 0 : i64, scratch_operands = 0 : i64, tpu.core_type = #tpu.core_type<tc>, window_params = [{transform_indices = @transform_0, window_bounds = array<i64: 1, 256, 4>}, {pipeline_mode = #tpu.pipeline_mode<synchronous>, transform_indices = @transform_1, window_bounds = array<i64: 32, 4>}, {pipeline_mode = #tpu.pipeline_mode<synchronous>, transform_indices = @transform_2, window_bounds = array<i64: 32, 1>}, {pipeline_mode = #tpu.pipeline_mode<synchronous>, transform_indices = @transform_3, window_bounds = array<i64: 32, 32>}, {pipeline_mode = #tpu.pipeline_mode<synchronous>, transform_indices = @transform_4, window_bounds = array<i64: 32, 1>}, {transform_indices = @transform_5, window_bounds = array<i64: 1, 32, 256>}]} {
    %c0 = arith.constant 0 : index
    %c0_0 = arith.constant 0 : index
    %c0_1 = arith.constant 0 : index
    %0 = vector.load %arg2[%c0, %c0_0, %c0_1] : memref<1x256x4xf32, #tpu.memory_space<vmem>>, vector<1x256x4xf32>
    %1 = vector.shape_cast %0 : vector<1x256x4xf32> to vector<256x4xf32>
    %c0_2 = arith.constant 0 : index
    %c0_3 = arith.constant 0 : index
    %2 = vector.load %arg3[%c0_2, %c0_3] : memref<32x4xf32, #tpu.memory_space<vmem>>, vector<32x4xf32>
    %cst = arith.constant dense<0.000000e+00> : vector<32x256xf32>
    %3 = tpu.matmul %2, %1, %cst {dimension_numbers = #tpu.dot_dimension_numbers<[1], [1], [0], [0], [0, 0, 1, 0], [], []>} : vector<32x4xf32>, vector<256x4xf32>, vector<32x256xf32> -> vector<32x256xf32>
    %c0_4 = arith.constant 0 : index
    %c0_5 = arith.constant 0 : index
    %4 = vector.load %arg4[%c0_4, %c0_5] : memref<32x1xf32, #tpu.memory_space<vmem>>, vector<32x1xf32>
    %5 = vector.broadcast %4 : vector<32x1xf32> to vector<32x256xf32>
    %6 = arith.addf %3, %5 : vector<32x256xf32>
    %cst_6 = arith.constant 0.000000e+00 : f32
    %7 = vector.broadcast %cst_6 : f32 to vector<32x256xf32>
    %8 = arith.maximumf %6, %7 : vector<32x256xf32>
    %c0_7 = arith.constant 0 : index
    %c0_8 = arith.constant 0 : index
    %9 = vector.load %arg5[%c0_7, %c0_8] : memref<32x32xf32, #tpu.memory_space<vmem>>, vector<32x32xf32>
    %cst_9 = arith.constant dense<0.000000e+00> : vector<32x256xf32>
    %10 = tpu.matmul %9, %8, %cst_9 {dimension_numbers = #tpu.dot_dimension_numbers<[1], [0], [0], [1], [0, 0, 1, 1], [], []>} : vector<32x32xf32>, vector<32x256xf32>, vector<32x256xf32> -> vector<32x256xf32>
    %c0_10 = arith.constant 0 : index
    %c0_11 = arith.constant 0 : index
    %11 = vector.load %arg6[%c0_10, %c0_11] : memref<32x1xf32, #tpu.memory_space<vmem>>, vector<32x1xf32>
    %12 = vector.broadcast %11 : vector<32x1xf32> to vector<32x256xf32>
    %13 = arith.addf %10, %12 : vector<32x256xf32>
    %c0_12 = arith.constant 0 : index
    %c0_13 = arith.constant 0 : index
    %c0_14 = arith.constant 0 : index
    %14 = vector.load %arg7[%c0_12, %c0_13, %c0_14] : memref<1x32x256xf32, #tpu.memory_space<vmem>>, vector<1x32x256xf32>
    %15 = vector.shape_cast %14 : vector<1x32x256xf32> to vector<32x256xf32>
    %16 = vector.shape_cast %13 : vector<32x256xf32> to vector<1x32x256xf32>
    tpu.vector_store %arg7[%c0_12, %c0_13, %c0_14], %16 {strides = array<i32>} : memref<1x32x256xf32, #tpu.memory_space<vmem>>, vector<1x32x256xf32>,
    return
  }
  func.func @transform_0(%arg0: i32, %arg1: i32) -> (i32, i32, i32) {
    %c0_i32 = arith.constant 0 : i32
    %c0_i32_0 = arith.constant 0 : i32
    return %arg0, %arg1, %c0_i32 : i32, i32, i32
  }
  func.func @transform_1(%arg0: i32, %arg1: i32) -> (i32, i32) {
    %c0_i32 = arith.constant 0 : i32
    %c0_i32_0 = arith.constant 0 : i32
    %c0_i32_1 = arith.constant 0 : i32
    return %c0_i32, %c0_i32_0 : i32, i32
  }
  func.func @transform_2(%arg0: i32, %arg1: i32) -> (i32, i32) {
    %c0_i32 = arith.constant 0 : i32
    %c0_i32_0 = arith.constant 0 : i32
    %c0_i32_1 = arith.constant 0 : i32
    return %c0_i32, %c0_i32_0 : i32, i32
  }
  func.func @transform_3(%arg0: i32, %arg1: i32) -> (i32, i32) {
    %c0_i32 = arith.constant 0 : i32
    %c0_i32_0 = arith.constant 0 : i32
    %c0_i32_1 = arith.constant 0 : i32
    return %c0_i32, %c0_i32_0 : i32, i32
  }
  func.func @transform_4(%arg0: i32, %arg1: i32) -> (i32, i32) {
    %c0_i32 = arith.constant 0 : i32
    %c0_i32_0 = arith.constant 0 : i32
    %c0_i32_1 = arith.constant 0 : i32
    return %c0_i32, %c0_i32_0 : i32, i32
  }
  func.func @transform_5(%arg0: i32, %arg1: i32) -> (i32, i32, i32) {
    %c0_i32 = arith.constant 0 : i32
    %c0_i32_0 = arith.constant 0 : i32
    return %arg0, %c0_i32, %arg1 : i32, i32, i32
  }
}

</mosaic_0001>

<llo_original>
// kernel: tpu_custom_call.1
$region0: #{tpu_custom_call.1}
  #allocation0 [shape = 'u32[]', space=smem, size = 0x4, offset = 0x4, fixed_abs, tag = 'smem constant byte address 0x4 - core index']
  #allocation1 [shape = 'u32[144,128]{1,0:T(1,128)}', space=vmem, size = 0x12000, scoped, tag = 'internal scratch']
  %s0 = inlined_call_operand.vmem [shape: f32[2,256,4], index: 0, kind: input, shape index: {}]
  %s1 = inlined_call_operand.vmem [shape: f32[32,4], index: 1, kind: input, shape index: {}]
  %s2 = inlined_call_operand.vmem [shape: f32[32,1], index: 2, kind: input, shape index: {}]
  %s3 = inlined_call_operand.vmem [shape: f32[32,32], index: 3, kind: input, shape index: {}]
  %s4 = inlined_call_operand.vmem [shape: f32[32,1], index: 4, kind: input, shape index: {}]
  %s5 = inlined_call_operand.hbm [shape: f32[2,32,256], index: 5, kind: output, shape index: {}]
  %s6 = sld [smem:[#allocation0]]
  $region53: #{tpu_custom_call.1} parent=0
    _
  %s8 = ssub.s32 1, %s6
  %s9 = scalar_select 0, %s8, %s6
  $region1: #{tpu_custom_call.1} parent=0
    #allocation2 [shape = 'u8[65536]{0}', space=vmem, size = 0x10000, scoped, tag = 'output window, operand 0']
    #allocation3 [shape = 's32[2]{0}', space=sflag, size = 0x8, scoped, tag = 'scoped memory for tpu_custom_call.1']
    %10 = vsyncpa [#allocation3], 0
    %s11 = scalar_lea.sflag [#allocation3], 1
    %12 = vsyncpa %s11, 0
    loop: start=0, step=1, limit=4
    $region2: #{tpu_custom_call.1} parent=1 // loop_pre_header
      _
    $region3: #{tpu_custom_call.1} parent=1 // loop_header
      %s14 = sphi 0, %s18
      %p15 = scmp.ge.s32.totalorder %s14, 4
      %s21 = sphi 0, %s33
      %s22 = sphi 0, %s29
      %s23 = sphi 0, %s21
      %s24 = sphi 0, %s22
      %s25 = sphi 0, %s23
      %s26 = sphi 0, %s24
      %s38 = sphi 0, %s40
      %s41 = sphi 0, %s38
      %s42 = sphi 0, %s41
      %s58 = sphi 0, %s42
      %s62 = sphi 0, %s62
      %s64 = sphi 0, %s62
      %s65 = sphi 0, %s64
      %s79 = sphi 0, %s65
      %s83 = sphi 0, %s83
      %s85 = sphi 0, %s83
      %s86 = sphi 0, %s85
      %s100 = sphi 0, %s86
      %s104 = sphi 0, %s104
      %s106 = sphi 0, %s104
      %s107 = sphi 0, %s106
      %s121 = sphi 0, %s107
      %s125 = sphi 0, %s125
      %s127 = sphi 0, %s125
      %s128 = sphi 0, %s127
      %s142 = sphi 0, %s128
      %s150 = sphi 0, %s152
      %s153 = sphi 0, %s150
      %s154 = sphi 0, %s153
      %s170 = sphi 0, %s154
    $region4: #{tpu_custom_call.1} parent=1 // loop_header_branch
      %17 = sbr.rel (%p15) target = $region8
    $region5: #{tpu_custom_call.1} parent=1 // loop_body
      %s19 = ssub.s32 %s14, 1
      %s20 = ssub.s32 %s14, 2
      %s27 = sadd.s32 1, %s22
      %p28 = scmp.ge.s32.totalorder %s27, 1
      %s29 = scalar_select %p28, 0, %s27
      %s30 = sadd.s32 1, %s21
      %s31 = scalar_select %p28, %s30, %s21
      %p32 = scmp.ge.s32.totalorder %s31, 2
      %s33 = scalar_select %p32, 0, %s31
      %s34 = ssub.s32 %s21, %s33
      %s35 = ssub.s32 %s22, %s29
      %s36 = sor.u32 %s34, %s35
      %p37 = scmp.eq.s32.totalorder %s36, 0
      %s39 = sadd.s32 %s38, 1
      %s40 = scalar_select %p37, %s38, %s39
      %p43 = pneg %p37
      %p44 = scmp.eq.s32.totalorder %s14, 1
      %p45 = por %p43, %p44
      %p46 = scmp.ne.s32.totalorder %s38, %s41
      %p47 = scmp.eq.s32.totalorder %s14, 0
      %p48 = por %p46, %p47
      %p49 = scmp.ne.s32.totalorder %s38, %s41
      %p50 = scmp.eq.s32.totalorder %s19, 1
      %p51 = por %p49, %p50
      %p52 = scmp.ne.s32.totalorder %s41, %s42
      %p53 = scmp.eq.s32.totalorder %s19, 0
      %p54 = por %p52, %p53
      %p55 = scmp.ne.s32.totalorder %s41, %s42
      %p56 = scmp.eq.s32.totalorder %s20, 1
      %p57 = por %p55, %p56
      %p59 = scmp.ne.s32.totalorder %s42, %s58
      %p60 = scmp.eq.s32.totalorder %s20, 0
      %p61 = por %p59, %p60
      %s63 = sadd.s32 %s62, 1
      %p66 = scmp.eq.s32.totalorder %s14, 1
      %p67 = scmp.ne.s32.totalorder %s62, %s64
      %p68 = scmp.eq.s32.totalorder %s14, 0
      %p69 = por %p67, %p68
      %p70 = scmp.ne.s32.totalorder %s62, %s64
      %p71 = scmp.eq.s32.totalorder %s19, 1
      %p72 = por %p70, %p71
      %p73 = scmp.ne.s32.totalorder %s64, %s65
      %p74 = scmp.eq.s32.totalorder %s19, 0
      %p75 = por %p73, %p74
      %p76 = scmp.ne.s32.totalorder %s64, %s65
      %p77 = scmp.eq.s32.totalorder %s20, 1
      %p78 = por %p76, %p77
      %p80 = scmp.ne.s32.totalorder %s65, %s79
      %p81 = scmp.eq.s32.totalorder %s20, 0
      %p82 = por %p80, %p81
      %s84 = sadd.s32 %s83, 1
      %p87 = scmp.eq.s32.totalorder %s14, 1
      %p88 = scmp.ne.s32.totalorder %s83, %s85
      %p89 = scmp.eq.s32.totalorder %s14, 0
      %p90 = por %p88, %p89
      %p91 = scmp.ne.s32.totalorder %s83, %s85
      %p92 = scmp.eq.s32.totalorder %s19, 1
      %p93 = por %p91, %p92
      %p94 = scmp.ne.s32.totalorder %s85, %s86
      %p95 = scmp.eq.s32.totalorder %s19, 0
      %p96 = por %p94, %p95
      %p97 = scmp.ne.s32.totalorder %s85, %s86
      %p98 = scmp.eq.s32.totalorder %s20, 1
      %p99 = por %p97, %p98
      %p101 = scmp.ne.s32.totalorder %s86, %s100
      %p102 = scmp.eq.s32.totalorder %s20, 0
      %p103 = por %p101, %p102
      %s105 = sadd.s32 %s104, 1
      %p108 = scmp.eq.s32.totalorder %s14, 1
      %p109 = scmp.ne.s32.totalorder %s104, %s106
      %p110 = scmp.eq.s32.totalorder %s14, 0
      %p111 = por %p109, %p110
      %p112 = scmp.ne.s32.totalorder %s104, %s106
      %p113 = scmp.eq.s32.totalorder %s19, 1
      %p114 = por %p112, %p113
      %p115 = scmp.ne.s32.totalorder %s106, %s107
      %p116 = scmp.eq.s32.totalorder %s19, 0
      %p117 = por %p115, %p116
      %p118 = scmp.ne.s32.totalorder %s106, %s107
      %p119 = scmp.eq.s32.totalorder %s20, 1
      %p120 = por %p118, %p119
      %p122 = scmp.ne.s32.totalorder %s107, %s121
      %p123 = scmp.eq.s32.totalorder %s20, 0
      %p124 = por %p122, %p123
      %s126 = sadd.s32 %s125, 1
      %p129 = scmp.eq.s32.totalorder %s14, 1
      %p130 = scmp.ne.s32.totalorder %s125, %s127
      %p131 = scmp.eq.s32.totalorder %s14, 0
      %p132 = por %p130, %p131
      %p133 = scmp.ne.s32.totalorder %s125, %s127
      %p134 = scmp.eq.s32.totalorder %s19, 1
      %p135 = por %p133, %p134
      %p136 = scmp.ne.s32.totalorder %s127, %s128
      %p137 = scmp.eq.s32.totalorder %s19, 0
      %p138 = por %p136, %p137
      %p139 = scmp.ne.s32.totalorder %s127, %s128
      %p140 = scmp.eq.s32.totalorder %s20, 1
      %p141 = por %p139, %p140
      %p143 = scmp.ne.s32.totalorder %s128, %s142
      %p144 = scmp.eq.s32.totalorder %s20, 0
      %p145 = por %p143, %p144
      %s146 = ssub.s32 %s21, %s33
      %s147 = ssub.s32 %s22, %s29
      %s148 = sor.u32 %s146, %s147
      %p149 = scmp.eq.s32.totalorder %s148, 0
      %s151 = sadd.s32 %s150, 1
      %s152 = scalar_select %p149, %s150, %s151
      %p155 = pneg %p149
      %p156 = scmp.eq.s32.totalorder %s14, 1
      %p157 = por %p155, %p156
      %p158 = scmp.ne.s32.totalorder %s150, %s153
      %p159 = scmp.eq.s32.totalorder %s14, 0
      %p160 = por %p158, %p159
      %p161 = scmp.ne.s32.totalorder %s150, %s153
      %p162 = scmp.eq.s32.totalorder %s19, 1
      %p163 = por %p161, %p162
      %p164 = scmp.ne.s32.totalorder %s153, %s154
      %p165 = scmp.eq.s32.totalorder %s19, 0
      %p166 = por %p164, %p165
      %p167 = scmp.ne.s32.totalorder %s153, %s154
      %p168 = scmp.eq.s32.totalorder %s20, 1
      %p169 = por %p167, %p168
      %p171 = scmp.ne.s32.totalorder %s154, %s170
      %p172 = scmp.eq.s32.totalorder %s20, 0
      %p173 = por %p171, %p172
      %p174 = scmp.le.s32.totalorder 1, %s14
      %p175 = scmp.lt.s32.totalorder %s14, 3
      %p176 = pnand %p174, %p175
      %p177 = pneg %p176
      // Predicated region
      $region9: #{tpu_custom_call.1} parent=5 // pred_check
        _
      $region10: #{tpu_custom_call.1} parent=5 // pred_check_branch
        %179 = sbr.rel (%p176) target = $region12
      $region11: #{tpu_custom_call.1} parent=5 // pred_region
        %s180 = ssub.s32 %s14, 1
        // Predicated region
        $region13: #{tpu_custom_call.1} parent=11 // pred_check
          %p181 = pneg %p75
        $region14: #{tpu_custom_call.1} parent=11 // pred_check_branch
          %183 = sbr.rel (%p181) target = $region16
        $region15: #{tpu_custom_call.1} parent=11 // pred_region
          _
        $region16: #{tpu_custom_call.1} parent=11 // pred_fallthru
          _
        // Predicated region
        $region17: #{tpu_custom_call.1} parent=11 // pred_check
          %p184 = pneg %p96
        $region18: #{tpu_custom_call.1} parent=11 // pred_check_branch
          %186 = sbr.rel (%p184) target = $region20
        $region19: #{tpu_custom_call.1} parent=11 // pred_region
          _
        $region20: #{tpu_custom_call.1} parent=11 // pred_fallthru
          _
        // Predicated region
        $region21: #{tpu_custom_call.1} parent=11 // pred_check
          %p187 = pneg %p117
        $region22: #{tpu_custom_call.1} parent=11 // pred_check_branch
          %189 = sbr.rel (%p187) target = $region24
        $region23: #{tpu_custom_call.1} parent=11 // pred_region
          _
        $region24: #{tpu_custom_call.1} parent=11 // pred_fallthru
          _
        // Predicated region
        $region25: #{tpu_custom_call.1} parent=11 // pred_check
          %p190 = pneg %p138
        $region26: #{tpu_custom_call.1} parent=11 // pred_check_branch
          %192 = sbr.rel (%p190) target = $region28
        $region27: #{tpu_custom_call.1} parent=11 // pred_region
          _
        $region28: #{tpu_custom_call.1} parent=11 // pred_fallthru
          _
      $region12: #{tpu_custom_call.1} parent=5 // pred_fallthru
        _
      %p193 = scmp.lt.s32.totalorder %s14, 2
      // Predicated region
      $region29: #{tpu_custom_call.1} parent=5 // pred_check
        %p194 = pneg %p193
      $region30: #{tpu_custom_call.1} parent=5 // pred_check_branch
        %196 = sbr.rel (%p194) target = $region32
      $region31: #{tpu_custom_call.1} parent=5 // pred_region
        // Predicated region
        $region33: #{tpu_custom_call.1} parent=31 // pred_check
          %p197 = pneg %p48
        $region34: #{tpu_custom_call.1} parent=31 // pred_check_branch
          %199 = sbr.rel (%p197) target = $region36
        $region35: #{tpu_custom_call.1} parent=31 // pred_region
          %s200 = smul.u32 32, %s22
          %p201 = scmp.lt.s32.totalorder %s21, 1
          %s202 = scalar_select %p201, %s21, 1
          %p203 = scmp.lt.s32.totalorder %s200, 31
          %s204 = scalar_select %p203, %s200, 31
          %s205 = smul.addr %s202, 32
          %s206 = sadd.s32 %s204, %s205
          %s207 = smul.addr %s206, 8
          %s208 = scalar_lea.vmem %s0, %s207
          %s209 = smul.u32 32, %s22
        $region36: #{tpu_custom_call.1} parent=31 // pred_fallthru
          _
      $region32: #{tpu_custom_call.1} parent=5 // pred_fallthru
        _
      %p210 = scmp.le.s32.totalorder 1, %s14
      %p211 = scmp.lt.s32.totalorder %s14, 3
      %p212 = pnand %p210, %p211
      %p213 = pneg %p212
      // Predicated region
      $region37: #{tpu_custom_call.1} parent=5 // pred_check
        _
      $region38: #{tpu_custom_call.1} parent=5 // pred_check_branch
        %215 = sbr.rel (%p212) target = $region40
      $region39: #{tpu_custom_call.1} parent=5 // pred_region
        %s216 = ssub.s32 %s14, 1
        %s217 = smul.u32 32, %s24
        %p218 = scmp.lt.s32.totalorder %s23, 1
        %s219 = scalar_select %p218, %s23, 1
        %p220 = scmp.lt.s32.totalorder %s217, 31
        %s221 = scalar_select %p220, %s217, 31
        %s222 = smul.addr %s219, 32
        %s223 = sadd.s32 %s221, %s222
        %s224 = smul.addr %s223, 8
        %s225 = scalar_lea.vmem %s0, %s224
        %p226 = pneg %p54
        %p227 = pneg %p51
        %p228 = pneg %p75
        %p229 = pneg %p72
        %p230 = pneg %p96
        %p231 = pneg %p93
        %p232 = pneg %p117
        %p233 = pneg %p114
        %p234 = pneg %p138
        %p235 = pneg %p135
        %p236 = pneg %p166
        %p237 = pneg %p163
        %s238 = sand.u32 %s153, 1
        %s239 = scalar_lea.sflag [#allocation3], %s238
        %s240 = sand.u32 %s153, 1
        %s241 = smul.addr %s240, 64
        %s242 = scalar_lea.vmem [#allocation2], %s241
        %s243 = smul.u32 32, %s24
        %p244 = scmp.lt.s32.totalorder %s23, 1
        %s245 = scalar_select %p244, %s23, 1
        %p246 = scmp.lt.s32.totalorder %s243, 31
        %s247 = scalar_select %p246, %s243, 31
        %s248 = smul.addr %s245, 32
        %s249 = sadd.s32 %s247, %s248
        %s250 = smul.addr %s249, 8
        %s251 = scalar_lea.vmem %s0, %s250
        %s252 = smul.u32 32, %s24
        %s253 = smul.u32 2, %s24
        %v254 = vld [vmem:[%s251] sm:$0xff]
        %v255 = vld [vmem:[%s251 + $0x8] sm:$0xff]
        %v256 = vld [vmem:[%s251 + $0x10] sm:$0xff]
        %v257 = vld [vmem:[%s251 + $0x18] sm:$0xff]
        %v258 = vld [vmem:[%s251 + $0x20] sm:$0xff]
        %v259 = vld [vmem:[%s251 + $0x28] sm:$0xff]
        %v260 = vld [vmem:[%s251 + $0x30] sm:$0xff]
        %v261 = vld [vmem:[%s251 + $0x38] sm:$0xff]
        %v262 = vld [vmem:[%s251 + $0x40] sm:$0xff]
        %v263 = vld [vmem:[%s251 + $0x48] sm:$0xff]
        %v264 = vld [vmem:[%s251 + $0x50] sm:$0xff]
        %v265 = vld [vmem:[%s251 + $0x58] sm:$0xff]
        %v266 = vld [vmem:[%s251 + $0x60] sm:$0xff]
        %v267 = vld [vmem:[%s251 + $0x68] sm:$0xff]
        %v268 = vld [vmem:[%s251 + $0x70] sm:$0xff]
        %v269 = vld [vmem:[%s251 + $0x78] sm:$0xff]
        %v270 = vld [vmem:[%s251 + $0x80] sm:$0xff]
        %v271 = vld [vmem:[%s251 + $0x88] sm:$0xff]
        %v272 = vld [vmem:[%s251 + $0x90] sm:$0xff]
        %v273 = vld [vmem:[%s251 + $0x98] sm:$0xff]
        %v274 = vld [vmem:[%s251 + $0xa0] sm:$0xff]
        %v275 = vld [vmem:[%s251 + $0xa8] sm:$0xff]
        %v276 = vld [vmem:[%s251 + $0xb0] sm:$0xff]
        %v277 = vld [vmem:[%s251 + $0xb8] sm:$0xff]
        %v278 = vld [vmem:[%s251 + $0xc0] sm:$0xff]
        %v279 = vld [vmem:[%s251 + $0xc8] sm:$0xff]
        %v280 = vld [vmem:[%s251 + $0xd0] sm:$0xff]
        %v281 = vld [vmem:[%s251 + $0xd8] sm:$0xff]
        %v282 = vld [vmem:[%s251 + $0xe0] sm:$0xff]
        %v283 = vld [vmem:[%s251 + $0xe8] sm:$0xff]
        %v284 = vld [vmem:[%s251 + $0xf0] sm:$0xff]
        %v285 = vld [vmem:[%s251 + $0xf8] sm:$0xff]
        %v286 = vld [vmem:[%s1] sm:$0xff]
        %v287 = vld [vmem:[%s1 + $0x8] sm:$0xff]
        %v288 = vld [vmem:[%s1 + $0x10] sm:$0xff]
        %v289 = vld [vmem:[%s1 + $0x18] sm:$0xff]
        %v290 = vld [vmem:[%s2] sm:$0xff]
        %v291 = vld [vmem:[%s2 + $0x8] sm:$0xff]
        %v292 = vld [vmem:[%s2 + $0x10] sm:$0xff]
        %v293 = vld [vmem:[%s2 + $0x18] sm:$0xff]
        %295 = vset.pattern.permute.xlu0 0
        %296 = vperm.xlu0 %295, %v290
        %v297 = vpop.permute.xlu0 %296
        %300 = vset.pattern.permute.xlu0 0
        %301 = vperm.xlu0 %300, %v291
        %v302 = vpop.permute.xlu0 %301
        %305 = vset.pattern.permute.xlu0 0
        %306 = vperm.xlu0 %305, %v292
        %v307 = vpop.permute.xlu0 %306
        %310 = vset.pattern.permute.xlu0 0
        %311 = vperm.xlu0 %310, %v293
        %v312 = vpop.permute.xlu0 %311
        %vm314 = vcmask 31744
        %v316 = vsel %vm314, %v286, 0
        %v319 = vsel %vm314, %v287, 0
        %v322 = vsel %vm314, %v288, 0
        %v325 = vsel %vm314, %v289, 0
        %v328 = vsel %vm314, %v254, 0
        %v331 = vsel %vm314, %v255, 0
        %v334 = vsel %vm314, %v256, 0
        %v337 = vsel %vm314, %v257, 0
        %v340 = vsel %vm314, %v258, 0
        %v343 = vsel %vm314, %v259, 0
        %v346 = vsel %vm314, %v260, 0
        %v349 = vsel %vm314, %v261, 0
        %v352 = vsel %vm314, %v262, 0
        %v355 = vsel %vm314, %v263, 0
        %v358 = vsel %vm314, %v264, 0
        %v361 = vsel %vm314, %v265, 0
        %v364 = vsel %vm314, %v266, 0
        %v367 = vsel %vm314, %v267, 0
        %v370 = vsel %vm314, %v268, 0
        %v373 = vsel %vm314, %v269, 0
        %v376 = vsel %vm314, %v270, 0
        %v379 = vsel %vm314, %v271, 0
        %v382 = vsel %vm314, %v272, 0
        %v385 = vsel %vm314, %v273, 0
        %v388 = vsel %vm314, %v274, 0
        %v391 = vsel %vm314, %v275, 0
        %v394 = vsel %vm314, %v276, 0
        %v397 = vsel %vm314, %v277, 0
        %v400 = vsel %vm314, %v278, 0
        %v403 = vsel %vm314, %v279, 0
        %v406 = vsel %vm314, %v280, 0
        %v409 = vsel %vm314, %v281, 0
        %v412 = vsel %vm314, %v282, 0
        %v415 = vsel %vm314, %v283, 0
        %v418 = vsel %vm314, %v284, 0
        %v421 = vsel %vm314, %v285, 0
        %423 = vmatprep.subr.mxu0 0.0
        %424 = vmatpush1.xpose.msra.mxu0 %v328
        %425 = vmatprep.subr.mxu0 0.0
        %426 = vmatpush1.xpose.msra.mxu0 %v331
        %427 = vmatprep.subr.mxu0 0.0
        %428 = vmatpush1.xpose.msra.mxu0 %v334
        %429 = vmatprep.subr.mxu0 0.0
        %430 = vmatpush1.xpose.msra.mxu0 %v337
        %431 = vmatprep.subr.mxu0 0.0
        %432 = vmatpush1.xpose.msra.mxu0 %v340
        %433 = vmatprep.subr.mxu0 0.0
        %434 = vmatpush1.xpose.msra.mxu0 %v343
        %435 = vmatprep.subr.mxu0 0.0
        %436 = vmatpush1.xpose.msra.mxu0 %v346
        %437 = vmatprep.subr.mxu0 0.0
        %438 = vmatpush1.xpose.msra.mxu0 %v349
        %439 = vmatprep.subr.mxu0 0.0
        %440 = vmatpush1.xpose.msra.mxu0 %v352
        %441 = vmatprep.subr.mxu0 0.0
        %442 = vmatpush1.xpose.msra.mxu0 %v355
        %443 = vmatprep.subr.mxu0 0.0
        %444 = vmatpush1.xpose.msra.mxu0 %v358
        %445 = vmatprep.subr.mxu0 0.0
        %446 = vmatpush1.xpose.msra.mxu0 %v361
        %447 = vmatprep.subr.mxu0 0.0
        %448 = vmatpush1.xpose.msra.mxu0 %v364
        %449 = vmatprep.subr.mxu0 0.0
        %450 = vmatpush1.xpose.msra.mxu0 %v367
        %451 = vmatprep.subr.mxu0 0.0
        %452 = vmatpush1.xpose.msra.mxu0 %v370
        %453 = vmatprep.subr.mxu0 0.0
        %454 = vmatpush1.xpose.msra.mxu0 %v373
        %455 = vmatprep.subr.mxu0 0.0
        %456 = vmatpush1.xpose.msra.mxu0 %v376
        %457 = vmatprep.subr.mxu0 0.0
        %458 = vmatpush1.xpose.msra.mxu0 %v379
        %459 = vmatprep.subr.mxu0 0.0
        %460 = vmatpush1.xpose.msra.mxu0 %v382
        %461 = vmatprep.subr.mxu0 0.0
        %462 = vmatpush1.xpose.msra.mxu0 %v385
        %463 = vmatprep.subr.mxu0 0.0
        %464 = vmatpush1.xpose.msra.mxu0 %v388
        %465 = vmatprep.subr.mxu0 0.0
        %466 = vmatpush1.xpose.msra.mxu0 %v391
        %467 = vmatprep.subr.mxu0 0.0
        %468 = vmatpush1.xpose.msra.mxu0 %v394
        %469 = vmatprep.subr.mxu0 0.0
        %470 = vmatpush1.xpose.msra.mxu0 %v397
        %471 = vmatprep.subr.mxu0 0.0
        %472 = vmatpush1.xpose.msra.mxu0 %v400
        %473 = vmatprep.subr.mxu0 0.0
        %474 = vmatpush1.xpose.msra.mxu0 %v403
        %475 = vmatprep.subr.mxu0 0.0
        %476 = vmatpush1.xpose.msra.mxu0 %v406
        %477 = vmatprep.subr.mxu0 0.0
        %478 = vmatpush1.xpose.msra.mxu0 %v409
        %479 = vmatprep.subr.mxu0 0.0
        %480 = vmatpush1.xpose.msra.mxu0 %v412
        %481 = vmatprep.subr.mxu0 0.0
        %482 = vmatpush1.xpose.msra.mxu0 %v415
        %483 = vmatprep.subr.mxu0 0.0
        %484 = vmatpush1.xpose.msra.mxu0 %v418
        %485 = vmatprep.subr.mxu0 0.0
        %486 = vmatpush1.xpose.msra.mxu0 %v421
        %487 = vmatprep.mubr.f32.mxu0 0.0
        %488 = vmatmul.mubr.f32.gmra.mrb[0].mxu0 %v316
        %v489 = vpop.f32.mrb[0].mxu0
        %v490 = vadd.f32 %v297, %v489
        %v491 = vpop.f32.mrb[0].mxu0
        %v492 = vadd.f32 %v297, %v491
        %493 = vmatprep.mubr.f32.mxu0 0.0
        %494 = vmatmul.mubr.f32.gmra.mrb[0].mxu0 %v319
        %v495 = vpop.f32.mrb[0].mxu0
        %v496 = vadd.f32 %v302, %v495
        %v497 = vpop.f32.mrb[0].mxu0
        %v498 = vadd.f32 %v302, %v497
        %499 = vmatprep.mubr.f32.mxu0 0.0
        %500 = vmatmul.mubr.f32.gmra.mrb[0].mxu0 %v322
        %v501 = vpop.f32.mrb[0].mxu0
        %v502 = vadd.f32 %v307, %v501
        %v503 = vpop.f32.mrb[0].mxu0
        %v504 = vadd.f32 %v307, %v503
        %505 = vmatprep.mubr.f32.mxu0 0.0
        %506 = vmatmul.mubr.f32.gmra.mrb[0].mxu0 %v325
        %v507 = vpop.f32.mrb[0].mxu0
        %v508 = vadd.f32 %v312, %v507
        %v509 = vpop.f32.mrb[0].mxu0
        %v510 = vadd.f32 %v312, %v509
        %511 = vdwg.mxu0
        %v512 = vmax.f32 %v490, 0.0
        %v513 = vmax.f32 %v492, 0.0
        %v514 = vmax.f32 %v496, 0.0
        %v515 = vmax.f32 %v498, 0.0
        %v516 = vmax.f32 %v502, 0.0
        %v517 = vmax.f32 %v504, 0.0
        %v518 = vmax.f32 %v508, 0.0
        %v519 = vmax.f32 %v510, 0.0
        %v520 = vld [vmem:[%s3] sm:$0xff]
        %v521 = vld [vmem:[%s3 + $0x8] sm:$0xff]
        %v522 = vld [vmem:[%s3 + $0x10] sm:$0xff]
        %v523 = vld [vmem:[%s3 + $0x18] sm:$0xff]
        %v524 = vld [vmem:[%s4] sm:$0xff]
        %v525 = vld [vmem:[%s4 + $0x8] sm:$0xff]
        %v526 = vld [vmem:[%s4 + $0x10] sm:$0xff]
        %v527 = vld [vmem:[%s4 + $0x18] sm:$0xff]
        %529 = vset.pattern.permute.xlu0 0
        %530 = vperm.xlu0 %529, %v524
        %v531 = vpop.permute.xlu0 %530
        %534 = vset.pattern.permute.xlu0 0
        %535 = vperm.xlu0 %534, %v525
        %v536 = vpop.permute.xlu0 %535
        %539 = vset.pattern.permute.xlu0 0
        %540 = vperm.xlu0 %539, %v526
        %v541 = vpop.permute.xlu0 %540
        %544 = vset.pattern.permute.xlu0 0
        %545 = vperm.xlu0 %544, %v527
        %v546 = vpop.permute.xlu0 %545
        %vm548 = vcmask 261120
        %v550 = vsel %vm548, %v520, 0
        %v553 = vsel %vm548, %v521, 0
        %v556 = vsel %vm548, %v522, 0
        %v559 = vsel %vm548, %v523, 0
        %561 = vmatprep.subr.mxu0 %v513
        %562 = vmatpush1.msra.mxu0 %v512
        %563 = vmatprep.subr.mxu0 %v515
        %564 = vmatpush1.msra.mxu0 %v514
        %565 = vmatprep.subr.mxu0 %v517
        %566 = vmatpush1.msra.mxu0 %v516
        %567 = vmatprep.subr.mxu0 %v519
        %568 = vmatpush1.msra.mxu0 %v518
        %569 = vmatprep.subr.mxu0 0.0
        %570 = vmatpush1.msra.mxu0 0.0
        %571 = vmatprep.subr.mxu0 0.0
        %572 = vmatpush1.msra.mxu0 0.0
        %573 = vmatprep.subr.mxu0 0.0
        %574 = vmatpush1.msra.mxu0 0.0
        %575 = vmatprep.subr.mxu0 0.0
        %576 = vmatpush1.msra.mxu0 0.0
        %577 = vmatprep.subr.mxu0 0.0
        %578 = vmatpush1.msra.mxu0 0.0
        %579 = vmatprep.subr.mxu0 0.0
        %580 = vmatpush1.msra.mxu0 0.0
        %581 = vmatprep.subr.mxu0 0.0
        %582 = vmatpush1.msra.mxu0 0.0
        %583 = vmatprep.subr.mxu0 0.0
        %584 = vmatpush1.msra.mxu0 0.0
        %585 = vmatprep.subr.mxu0 0.0
        %586 = vmatpush1.msra.mxu0 0.0
        %587 = vmatprep.subr.mxu0 0.0
        %588 = vmatpush1.msra.mxu0 0.0
        %589 = vmatprep.subr.mxu0 0.0
        %590 = vmatpush1.msra.mxu0 0.0
        %591 = vmatprep.subr.mxu0 0.0
        %592 = vmatpush1.msra.mxu0 0.0
        %593 = vmatprep.subr.mxu0 0.0
        %594 = vmatpush1.msra.mxu0 0.0
        %595 = vmatprep.subr.mxu0 0.0
        %596 = vmatpush1.msra.mxu0 0.0
        %597 = vmatprep.subr.mxu0 0.0
        %598 = vmatpush1.msra.mxu0 0.0
        %599 = vmatprep.subr.mxu0 0.0
        %600 = vmatpush1.msra.mxu0 0.0
        %601 = vmatprep.subr.mxu0 0.0
        %602 = vmatpush1.msra.mxu0 0.0
        %603 = vmatprep.subr.mxu0 0.0
        %604 = vmatpush1.msra.mxu0 0.0
        %605 = vmatprep.subr.mxu0 0.0
        %606 = vmatpush1.msra.mxu0 0.0
        %607 = vmatprep.subr.mxu0 0.0
        %608 = vmatpush1.msra.mxu0 0.0
        %609 = vmatprep.subr.mxu0 0.0
        %610 = vmatpush1.msra.mxu0 0.0
        %611 = vmatprep.subr.mxu0 0.0
        %612 = vmatpush1.msra.mxu0 0.0
        %613 = vmatprep.subr.mxu0 0.0
        %614 = vmatpush1.msra.mxu0 0.0
        %615 = vmatprep.subr.mxu0 0.0
        %616 = vmatpush1.msra.mxu0 0.0
        %617 = vmatprep.subr.mxu0 0.0
        %618 = vmatpush1.msra.mxu0 0.0
        %619 = vmatprep.subr.mxu0 0.0
        %620 = vmatpush1.msra.mxu0 0.0
        %621 = vmatprep.subr.mxu0 0.0
        %622 = vmatpush1.msra.mxu0 0.0
        %623 = vmatprep.subr.mxu0 0.0
        %624 = vmatpush1.msra.mxu0 0.0
        %625 = vmatprep.mubr.f32.mxu0 0.0
        %626 = vmatmul.mubr.f32.gmra.mrb[0].mxu0 %v550
        %v627 = vpop.f32.mrb[0].mxu0
        %v628 = vadd.f32 %v531, %v627
        %v629 = vpop.f32.mrb[0].mxu0
        %v630 = vadd.f32 %v531, %v629
        %631 = vmatprep.mubr.f32.mxu0 0.0
        %632 = vmatmul.mubr.f32.gmra.mrb[0].mxu0 %v553
        %v633 = vpop.f32.mrb[0].mxu0
        %v634 = vadd.f32 %v536, %v633
        %v635 = vpop.f32.mrb[0].mxu0
        %v636 = vadd.f32 %v536, %v635
        %637 = vmatprep.mubr.f32.mxu0 0.0
        %638 = vmatmul.mubr.f32.gmra.mrb[0].mxu0 %v556
        %v639 = vpop.f32.mrb[0].mxu0
        %v640 = vadd.f32 %v541, %v639
        %v641 = vpop.f32.mrb[0].mxu0
        %v642 = vadd.f32 %v541, %v641
        %643 = vmatprep.mubr.f32.mxu0 0.0
        %644 = vmatmul.mubr.f32.gmra.mrb[0].mxu0 %v559
        %v645 = vpop.f32.mrb[0].mxu0
        %v646 = vadd.f32 %v546, %v645
        %v647 = vpop.f32.mrb[0].mxu0
        %v648 = vadd.f32 %v546, %v647
        %649 = vdwg.mxu0
        %650 = vst [vmem:[%s242] sm:$0xff] %v628
        %651 = vst [vmem:[%s242 + $0x8] sm:$0xff] %v630
        %652 = vst [vmem:[%s242 + $0x10] sm:$0xff] %v634
        %653 = vst [vmem:[%s242 + $0x18] sm:$0xff] %v636
        %654 = vst [vmem:[%s242 + $0x20] sm:$0xff] %v640
        %655 = vst [vmem:[%s242 + $0x28] sm:$0xff] %v642
        %656 = vst [vmem:[%s242 + $0x30] sm:$0xff] %v646
        %657 = vst [vmem:[%s242 + $0x38] sm:$0xff] %v648
        %s658 = sand.u32 %s153, 1
        %s659 = scalar_lea.sflag [#allocation3], %s658
        %s660 = sand.u32 %s153, 1
        %s661 = smul.addr %s660, 64
        %s662 = scalar_lea.vmem [#allocation2], %s661
        // Predicated region
        $region41: #{tpu_custom_call.1} parent=39 // pred_check
          %p663 = pneg %p163
        $region42: #{tpu_custom_call.1} parent=39 // pred_check_branch
          %665 = sbr.rel (%p663) target = $region44
        $region43: #{tpu_custom_call.1} parent=39 // pred_region
          %s666 = smul.u32 2, %s24
          %s668 = ssub.s32 1024, 1024
          %669 = vsyncadd %s659, %s668
          %s670 = smul.addr %s23, 8
          %s671 = sadd.s32 %s666, %s670
          %s672 = smul.addr %s671, 128
          %s673 = scalar_lea.hbm %s5, %s672
          %s674 = sshll.u32 %s662, 4
          %s675 = int_to_ptr.vmem [resolvable:$true] %s674
          %680 = dma.vmem_to_hbm [thread:$0]  %s675, 1024, %s673, %s659, 256, 256, 16
        $region44: #{tpu_custom_call.1} parent=39 // pred_fallthru
          _
      $region40: #{tpu_custom_call.1} parent=5 // pred_fallthru
        _
      %p681 = scmp.le.s32.totalorder 2, %s14
      // Predicated region
      $region45: #{tpu_custom_call.1} parent=5 // pred_check
        %p682 = pneg %p681
      $region46: #{tpu_custom_call.1} parent=5 // pred_check_branch
        %684 = sbr.rel (%p682) target = $region48
      $region47: #{tpu_custom_call.1} parent=5 // pred_region
        %s685 = ssub.s32 %s14, 2
        // Predicated region
        $region49: #{tpu_custom_call.1} parent=47 // pred_check
          %p686 = pneg %p169
        $region50: #{tpu_custom_call.1} parent=47 // pred_check_branch
          %688 = sbr.rel (%p686) target = $region52
        $region51: #{tpu_custom_call.1} parent=47 // pred_region
          %s689 = sand.u32 %s154, 1
          %s690 = scalar_lea.sflag [#allocation3], %s689
          %s691 = sand.u32 %s154, 1
          %s692 = smul.addr %s691, 64
          %s693 = scalar_lea.vmem [#allocation2], %s692
          %694 = dma.done %s690, 1024
        $region52: #{tpu_custom_call.1} parent=47 // pred_fallthru
          _
      $region48: #{tpu_custom_call.1} parent=5 // pred_fallthru
        _
    $region6: #{tpu_custom_call.1} parent=1 // loop_footer
      %s18 = sadd.s32 1, %s14
    $region7: #{tpu_custom_call.1} parent=1 // loop_footer_branch
      %13 = sbr.rel target = $region3
    $region8: #{tpu_custom_call.1} parent=1 // loop_exit
      _
    %695 = vsyncpa [#allocation3], 1
    %s696 = scalar_lea.sflag [#allocation3], 1
    %697 = vsyncpa %s696, 1

</llo_original>
